<compile_context>
chip_gen: v5e
topology: v5e:2x2
jax: 0.10.0
libtpu: 0.0.40
codegen_flags: <defaults>
</compile_context>

<pallas_src>
import math

import jax
import jax.numpy as jnp
import numpy as np
from jax import lax
from jax.experimental import pallas as pl
from jax.experimental.pallas import tpu as pltpu

# ---- model config (small, consistent with GPTBigCodeConfig) ----------------
SEQ = 8                          # num tokens
HIDDEN = 32                      # hidden_size
NUM_HEADS = 4                    # num_attention_heads
HEAD_DIM = HIDDEN // NUM_HEADS   # 8
KV_DIM = HEAD_DIM                # multi_query=True -> 1 kv head
INNER = 4 * HIDDEN               # n_inner default = 4 * hidden (= 128)
EPS = 1e-5
SCALE = HEAD_DIM ** -0.5
NEG_INF = -1e30                  # safe: every causal row includes its diagonal

# ---- packed-slab layout (lane-dense, (8,128)-aligned) -----------------------
LANES = 128
QKV_COLS = HIDDEN + 2 * KV_DIM   # 48
W_ROWS = 2 * HIDDEN + INNER      # 192
# weight slab (bf16):
#   rows [0,32)    lanes [0,48)   : fused c_attn weight  (Wq*scale | Wk | Wv)
#   rows [0,32)    lanes [48,80)  : attention c_proj weight Wo
#   rows [32,64)   lanes [0,128)  : mlp c_fc weight
#   rows [64,192)  lanes [0,32)   : mlp c_proj weight
# bias/LN slab (f32, one vreg [8,128]):
#   row 0 ln1_w | 1 ln1_b | 2 (bq*scale|bk|bv) | 3 bo | 4 ln2_w | 5 ln2_b
#   row 6 bfc   | 7 bfp


def _layernorm(h, w, b):
    mu = jnp.mean(h, axis=-1, keepdims=True)
    var = jnp.mean((h - mu) ** 2, axis=-1, keepdims=True)
    return (h - mu) * lax.rsqrt(var + EPS) * w + b


def _gelu_tanh(x):
    # gelu_pytorch_tanh (GPT-BigCode default activation)
    c = math.sqrt(2.0 / math.pi)
    return 0.5 * x * (1.0 + jnp.tanh(c * (x + 0.044715 * x * x * x)))


def gpt_bigcode_block_kernel(x_ref, w_ref, b_ref, out_ref):
    # ---- carve the packed slabs (static views, no per-tensor DMA) ----
    w_attn = w_ref[0:HIDDEN, 0:QKV_COLS]                      # [32,48] bf16
    w_o = w_ref[0:HIDDEN, QKV_COLS:QKV_COLS + HIDDEN]         # [32,32] bf16
    w_fc = w_ref[HIDDEN:2 * HIDDEN, 0:INNER]                  # [32,128] bf16
    w_fp = w_ref[2 * HIDDEN:2 * HIDDEN + INNER, 0:HIDDEN]     # [128,32] bf16

    ln1_w = b_ref[0:1, 0:HIDDEN]
    ln1_b = b_ref[1:2, 0:HIDDEN]
    b_attn = b_ref[2:3, 0:QKV_COLS]
    b_o = b_ref[3:4, 0:HIDDEN]
    ln2_w = b_ref[4:5, 0:HIDDEN]
    ln2_b = b_ref[5:6, 0:HIDDEN]
    b_fc = b_ref[6:7, 0:INNER]
    b_fp = b_ref[7:8, 0:HIDDEN]

    x = x_ref[...].astype(jnp.float32)                        # [8,32]
    residual = x

    # ---- ln_1 (f32 VPU/EUP math) ----
    h = _layernorm(x, ln1_w, ln1_b)

    # ---- c_attn: ONE fused qkv matmul (scale already folded into Wq/bq) ----
    qkv = jnp.dot(h.astype(jnp.bfloat16), w_attn,
                  preferred_element_type=jnp.float32) + b_attn        # [8,48]
    k = qkv[:, HIDDEN:HIDDEN + KV_DIM]                                # [8,8]
    v = qkv[:, HIDDEN + KV_DIM:QKV_COLS]                              # [8,8]

    # Head-major fold of q: [8,32] -> [NUM_HEADS*8, 8] (cheap XLU relayout).
    q_folded = jnp.concatenate(
        [qkv[:, hh * HEAD_DIM:(hh + 1) * HEAD_DIM] for hh in range(NUM_HEADS)],
        axis=0)

    # ---- causal multi-query attention: ONE scores matmul, ONE p@v matmul ----
    # k-transpose folded into dot_general (contract last dims).
    scores = lax.dot_general(
        q_folded.astype(jnp.bfloat16), k.astype(jnp.bfloat16),
        dimension_numbers=(((1,), (1,)), ((), ())),
        preferred_element_type=jnp.float32)                           # [32,8]

    # Additive causal mask generated in-kernel (no mask input / DMA).
    ri = lax.broadcasted_iota(jnp.int32, (SEQ, SEQ), 0)
    ci = lax.broadcasted_iota(jnp.int32, (SEQ, SEQ), 1)
    mask = jnp.where(ri >= ci, 0.0, NEG_INF).astype(jnp.float32)      # [8,8]
    scores = scores + jnp.concatenate([mask] * NUM_HEADS, axis=0)     # [32,8]

    scores = scores - jnp.max(scores, axis=-1, keepdims=True)
    p = jnp.exp(scores)
    p = p * pl.reciprocal(jnp.sum(p, axis=-1, keepdims=True), approx=True)
    o_folded = jnp.dot(p.astype(jnp.bfloat16), v.astype(jnp.bfloat16),
                       preferred_element_type=jnp.float32)            # [32,8]

    # Unfold back to token-major [8,32] and do ONE c_proj matmul.
    o_lane = jnp.concatenate(
        [o_folded[hh * SEQ:(hh + 1) * SEQ, :] for hh in range(NUM_HEADS)],
        axis=1)                                                       # [8,32]
    attn = jnp.dot(o_lane.astype(jnp.bfloat16), w_o,
                   preferred_element_type=jnp.float32) + b_o

    h = attn + residual
    residual = h

    # ---- ln_2 + MLP: c_fc -> gelu(tanh) -> c_proj ----
    h = _layernorm(h, ln2_w, ln2_b)
    h = jnp.dot(h.astype(jnp.bfloat16), w_fc,
                preferred_element_type=jnp.float32) + b_fc
    h = _gelu_tanh(h)
    h = jnp.dot(h.astype(jnp.bfloat16), w_fp,
                preferred_element_type=jnp.float32) + b_fp
    y = h + residual                                                  # [8,32]

    # Lane-dense (128-wide) unmasked store; wrapper slices back to [8,32].
    pad = jnp.zeros((SEQ, LANES - HIDDEN), jnp.float32)
    out_ref[...] = jnp.concatenate([y, pad], axis=1).astype(out_ref.dtype)


def _pack_params(params):
    """Host-side (free) re-layout into 2 lane-dense slabs."""
    # Fold the attention scale into the q columns of the fused c_attn params.
    col_scale = jnp.concatenate(
        [jnp.full((HIDDEN,), SCALE, jnp.float32),
         jnp.ones((2 * KV_DIM,), jnp.float32)])[None, :]
    w_attn = params["wqkv"] * col_scale
    b_attn = params["bqkv"] * col_scale

    w_slab = jnp.zeros((W_ROWS, LANES), jnp.float32)
    w_slab = w_slab.at[0:HIDDEN, 0:QKV_COLS].set(w_attn)
    w_slab = w_slab.at[0:HIDDEN, QKV_COLS:QKV_COLS + HIDDEN].set(params["wo"])
    w_slab = w_slab.at[HIDDEN:2 * HIDDEN, 0:INNER].set(params["wfc"])
    w_slab = w_slab.at[2 * HIDDEN:2 * HIDDEN + INNER, 0:HIDDEN].set(params["wfp"])
    w_slab = w_slab.astype(jnp.bfloat16)

    b_slab = jnp.zeros((8, LANES), jnp.float32)
    b_slab = b_slab.at[0:1, 0:HIDDEN].set(params["ln1_w"])
    b_slab = b_slab.at[1:2, 0:HIDDEN].set(params["ln1_b"])
    b_slab = b_slab.at[2:3, 0:QKV_COLS].set(b_attn)
    b_slab = b_slab.at[3:4, 0:HIDDEN].set(params["bo"])
    b_slab = b_slab.at[4:5, 0:HIDDEN].set(params["ln2_w"])
    b_slab = b_slab.at[5:6, 0:HIDDEN].set(params["ln2_b"])
    b_slab = b_slab.at[6:7, 0:INNER].set(params["bfc"])
    b_slab = b_slab.at[7:8, 0:HIDDEN].set(params["bfp"])
    return w_slab, b_slab


def gpt_bigcode_block(x, params):
    w_slab, b_slab = _pack_params(params)
    vmem = pl.BlockSpec(memory_space=pltpu.MemorySpace.VMEM)
    out = pl.pallas_call(
        gpt_bigcode_block_kernel,
        out_shape=jax.ShapeDtypeStruct((SEQ, LANES), jnp.float32),
        in_specs=[vmem, vmem, vmem],
        out_specs=vmem,
    )(x, w_slab, b_slab)
    return out[:, :HIDDEN]


# ---- pure-JAX f32 reference (faithful to the PyTorch module) ----------------
def reference_block(x, p):
    x = x.astype(jnp.float32)
    residual = x
    h = _layernorm(x, p["ln1_w"], p["ln1_b"])
    qkv = h @ p["wqkv"] + p["bqkv"]
    q, k, v = qkv[:, :HIDDEN], qkv[:, HIDDEN:HIDDEN + KV_DIM], qkv[:, HIDDEN + KV_DIM:]
    row = np.arange(SEQ)[:, None]
    col = np.arange(SEQ)[None, :]
    causal = jnp.asarray(row >= col)
    outs = []
    for hh in range(NUM_HEADS):
        q_h = q[:, hh * HEAD_DIM:(hh + 1) * HEAD_DIM]
        s = (q_h @ k.T) * SCALE
        s = jnp.where(causal, s, NEG_INF)
        p_ = jax.nn.softmax(s, axis=-1)
        outs.append(p_ @ v)
    attn = jnp.concatenate(outs, axis=-1)
    attn = attn @ p["wo"] + p["bo"]
    h = attn + residual
    residual = h
    h = _layernorm(h, p["ln2_w"], p["ln2_b"])
    h = h @ p["wfc"] + p["bfc"]
    h = _gelu_tanh(h)
    h = h @ p["wfp"] + p["bfp"]
    return h + residual


def init_params(key):
    ks = jax.random.split(key, 8)
    s = 0.02
    return {
        "ln1_w": jnp.ones((1, HIDDEN), jnp.float32),
        "ln1_b": jnp.zeros((1, HIDDEN), jnp.float32),
        "wqkv": s * jax.random.normal(ks[0], (HIDDEN, HIDDEN + 2 * KV_DIM), jnp.float32),
        "bqkv": s * jax.random.normal(ks[1], (1, HIDDEN + 2 * KV_DIM), jnp.float32),
        "wo": s * jax.random.normal(ks[2], (HIDDEN, HIDDEN), jnp.float32),
        "bo": s * jax.random.normal(ks[3], (1, HIDDEN), jnp.float32),
        "ln2_w": jnp.ones((1, HIDDEN), jnp.float32),
        "ln2_b": jnp.zeros((1, HIDDEN), jnp.float32),
        "wfc": s * jax.random.normal(ks[4], (HIDDEN, INNER), jnp.float32),
        "bfc": s * jax.random.normal(ks[5], (1, INNER), jnp.float32),
        "wfp": s * jax.random.normal(ks[6], (INNER, HIDDEN), jnp.float32),
        "bfp": s * jax.random.normal(ks[7], (1, HIDDEN), jnp.float32),
    }


if __name__ == "__main__":
    key = jax.random.PRNGKey(0)
    k_x, k_p = jax.random.split(key)
    x = jax.random.normal(k_x, (SEQ, HIDDEN), jnp.float32)
    params = init_params(k_p)

    out = gpt_bigcode_block(x, params)
    out = jax.block_until_ready(out)

    ref = jax.block_until_ready(reference_block(x, params))
    # bf16 weights/matmul inputs + approx reciprocal in the softmax
    # denominator vs. the pure-f32 reference -> 1e-2 tolerance.
    np.testing.assert_allclose(np.asarray(out), np.asarray(ref), rtol=1e-2, atol=1e-2)

    print("KERNEL_OK")
</pallas_src>

<mosaic_0001>
module attributes {stable_mosaic.version = 11 : i64} {
  func.func @gpt_bigcode_block_kernel(%arg0: memref<8x32xf32, #tpu.memory_space<vmem>>, %arg1: memref<192x128xbf16, #tpu.memory_space<vmem>>, %arg2: memref<8x128xf32, #tpu.memory_space<vmem>>, %arg3: memref<8x128xf32, #tpu.memory_space<vmem>>) attributes {dimension_semantics = [], scalar_prefetch = 0 : i64, scratch_operands = 0 : i64, tpu.core_type = #tpu.core_type<tc>} {
    %c0 = arith.constant 0 : index
    %c0_0 = arith.constant 0 : index
    %0 = vector.load %arg1[%c0, %c0_0] : memref<192x128xbf16, #tpu.memory_space<vmem>>, vector<32x48xbf16>
    %c0_1 = arith.constant 0 : index
    %c48 = arith.constant 48 : index
    %1 = vector.load %arg1[%c0_1, %c48] : memref<192x128xbf16, #tpu.memory_space<vmem>>, vector<32x32xbf16>
    %c32 = arith.constant 32 : index
    %c0_2 = arith.constant 0 : index
    %2 = vector.load %arg1[%c32, %c0_2] : memref<192x128xbf16, #tpu.memory_space<vmem>>, vector<32x128xbf16>
    %c64 = arith.constant 64 : index
    %c0_3 = arith.constant 0 : index
    %3 = vector.load %arg1[%c64, %c0_3] : memref<192x128xbf16, #tpu.memory_space<vmem>>, vector<128x32xbf16>
    %c0_4 = arith.constant 0 : index
    %c0_5 = arith.constant 0 : index
    %4 = vector.load %arg2[%c0_4, %c0_5] : memref<8x128xf32, #tpu.memory_space<vmem>>, vector<1x32xf32>
    %c1 = arith.constant 1 : index
    %c0_6 = arith.constant 0 : index
    %5 = vector.load %arg2[%c1, %c0_6] : memref<8x128xf32, #tpu.memory_space<vmem>>, vector<1x32xf32>
    %c2 = arith.constant 2 : index
    %c0_7 = arith.constant 0 : index
    %6 = vector.load %arg2[%c2, %c0_7] : memref<8x128xf32, #tpu.memory_space<vmem>>, vector<1x48xf32>
    %c3 = arith.constant 3 : index
    %c0_8 = arith.constant 0 : index
    %7 = vector.load %arg2[%c3, %c0_8] : memref<8x128xf32, #tpu.memory_space<vmem>>, vector<1x32xf32>
    %c4 = arith.constant 4 : index
    %c0_9 = arith.constant 0 : index
    %8 = vector.load %arg2[%c4, %c0_9] : memref<8x128xf32, #tpu.memory_space<vmem>>, vector<1x32xf32>
    %c5 = arith.constant 5 : index
    %c0_10 = arith.constant 0 : index
    %9 = vector.load %arg2[%c5, %c0_10] : memref<8x128xf32, #tpu.memory_space<vmem>>, vector<1x32xf32>
    %c6 = arith.constant 6 : index
    %c0_11 = arith.constant 0 : index
    %10 = vector.load %arg2[%c6, %c0_11] : memref<8x128xf32, #tpu.memory_space<vmem>>, vector<1x128xf32>
    %c7 = arith.constant 7 : index
    %c0_12 = arith.constant 0 : index
    %11 = vector.load %arg2[%c7, %c0_12] : memref<8x128xf32, #tpu.memory_space<vmem>>, vector<1x32xf32>
    %c0_13 = arith.constant 0 : index
    %c0_14 = arith.constant 0 : index
    %12 = vector.load %arg0[%c0_13, %c0_14] : memref<8x32xf32, #tpu.memory_space<vmem>>, vector<8x32xf32>
    %cst = arith.constant dense<0.000000e+00> : vector<8xf32>
    %13 = vector.multi_reduction <add>, %12, %cst [1] : vector<8x32xf32> to vector<8xf32>
    %14 = vector.shape_cast %13 : vector<8xf32> to vector<8x1xf32>
    %cst_15 = arith.constant 3.200000e+01 : f32
    %15 = vector.broadcast %cst_15 : f32 to vector<8x1xf32>
    %16 = arith.divf %14, %15 : vector<8x1xf32>
    %17 = vector.broadcast %16 : vector<8x1xf32> to vector<8x32xf32>
    %18 = arith.subf %12, %17 : vector<8x32xf32>
    %19 = arith.mulf %18, %18 : vector<8x32xf32>
    %cst_16 = arith.constant dense<0.000000e+00> : vector<8xf32>
    %20 = vector.multi_reduction <add>, %19, %cst_16 [1] : vector<8x32xf32> to vector<8xf32>
    %21 = vector.shape_cast %20 : vector<8xf32> to vector<8x1xf32>
    %cst_17 = arith.constant 3.200000e+01 : f32
    %22 = vector.broadcast %cst_17 : f32 to vector<8x1xf32>
    %23 = arith.divf %21, %22 : vector<8x1xf32>
    %24 = vector.broadcast %16 : vector<8x1xf32> to vector<8x32xf32>
    %25 = arith.subf %12, %24 : vector<8x32xf32>
    %cst_18 = arith.constant 9.99999974E-6 : f32
    %26 = vector.broadcast %cst_18 : f32 to vector<8x1xf32>
    %27 = arith.addf %23, %26 : vector<8x1xf32>
    %28 = math.rsqrt %27 : vector<8x1xf32>
    %29 = vector.broadcast %28 : vector<8x1xf32> to vector<8x32xf32>
    %30 = arith.mulf %25, %29 : vector<8x32xf32>
    %31 = vector.broadcast %4 : vector<1x32xf32> to vector<8x32xf32>
    %32 = arith.mulf %30, %31 : vector<8x32xf32>
    %33 = vector.broadcast %5 : vector<1x32xf32> to vector<8x32xf32>
    %34 = arith.addf %32, %33 : vector<8x32xf32>
    %35 = arith.truncf %34 : vector<8x32xf32> to vector<8x32xbf16>
    %cst_19 = arith.constant dense<0.000000e+00> : vector<8x48xf32>
    %36 = tpu.matmul %35, %0, %cst_19 {dimension_numbers = #tpu.dot_dimension_numbers<[1], [0], [0], [1], [0, 0, 1, 1], [], []>} : vector<8x32xbf16>, vector<32x48xbf16>, vector<8x48xf32> -> vector<8x48xf32>
    %37 = vector.broadcast %6 : vector<1x48xf32> to vector<8x48xf32>
    %38 = arith.addf %36, %37 : vector<8x48xf32>
    %39 = vector.extract_strided_slice %38 {offsets = [0, 32], sizes = [8, 8], strides = [1, 1]} : vector<8x48xf32> to vector<8x8xf32>
    %40 = vector.extract_strided_slice %38 {offsets = [0, 40], sizes = [8, 8], strides = [1, 1]} : vector<8x48xf32> to vector<8x8xf32>
    %41 = vector.extract_strided_slice %38 {offsets = [0, 0], sizes = [8, 8], strides = [1, 1]} : vector<8x48xf32> to vector<8x8xf32>
    %42 = vector.extract_strided_slice %38 {offsets = [0, 8], sizes = [8, 8], strides = [1, 1]} : vector<8x48xf32> to vector<8x8xf32>
    %43 = vector.extract_strided_slice %38 {offsets = [0, 16], sizes = [8, 8], strides = [1, 1]} : vector<8x48xf32> to vector<8x8xf32>
    %44 = vector.extract_strided_slice %38 {offsets = [0, 24], sizes = [8, 8], strides = [1, 1]} : vector<8x48xf32> to vector<8x8xf32>
    %45 = tpu.concatenate %41, %42, %43, %44 in 0 : vector<8x8xf32>, vector<8x8xf32>, vector<8x8xf32>, vector<8x8xf32> -> vector<32x8xf32>
    %46 = arith.truncf %45 : vector<32x8xf32> to vector<32x8xbf16>
    %47 = arith.truncf %39 : vector<8x8xf32> to vector<8x8xbf16>
    %cst_20 = arith.constant dense<0.000000e+00> : vector<32x8xf32>
    %48 = tpu.matmul %46, %47, %cst_20 {dimension_numbers = #tpu.dot_dimension_numbers<[1], [1], [0], [0], [0, 0, 1, 0], [], []>} : vector<32x8xbf16>, vector<8x8xbf16>, vector<32x8xf32> -> vector<32x8xf32>
    %49 = tpu.iota {dimensions = array<i32: 0>} : vector<8x8xi32>
    %50 = tpu.iota {dimensions = array<i32: 1>} : vector<8x8xi32>
    %51 = arith.cmpi sge, %49, %50 : vector<8x8xi32>
    %cst_21 = arith.constant 0.000000e+00 : f32
    %cst_22 = arith.constant -1.000000e+30 : f32
    %52 = vector.broadcast %cst_21 : f32 to vector<8x8xf32>
    %53 = vector.broadcast %cst_22 : f32 to vector<8x8xf32>
    %54 = arith.select %51, %52, %53 : vector<8x8xi1>, vector<8x8xf32>
    %55 = tpu.concatenate %54, %54, %54, %54 in 0 : vector<8x8xf32>, vector<8x8xf32>, vector<8x8xf32>, vector<8x8xf32> -> vector<32x8xf32>
    %56 = arith.addf %48, %55 : vector<32x8xf32>
    %cst_23 = arith.constant dense<0xFF800000> : vector<32xf32>
    %57 = vector.multi_reduction <maximumf>, %56, %cst_23 [1] : vector<32x8xf32> to vector<32xf32>
    %58 = vector.shape_cast %57 : vector<32xf32> to vector<32x1xf32>
    %59 = vector.broadcast %58 : vector<32x1xf32> to vector<32x8xf32>
    %60 = arith.subf %56, %59 : vector<32x8xf32>
    %61 = math.exp %60 : vector<32x8xf32>
    %cst_24 = arith.constant dense<0.000000e+00> : vector<32xf32>
    %62 = vector.multi_reduction <add>, %61, %cst_24 [1] : vector<32x8xf32> to vector<32xf32>
    %63 = vector.shape_cast %62 : vector<32xf32> to vector<32x1xf32>
    %64 = tpu.reciprocal %63 {approx = true} : vector<32x1xf32> -> vector<32x1xf32>
    %65 = vector.broadcast %64 : vector<32x1xf32> to vector<32x8xf32>
    %66 = arith.mulf %61, %65 : vector<32x8xf32>
    %67 = arith.truncf %66 : vector<32x8xf32> to vector<32x8xbf16>
    %68 = arith.truncf %40 : vector<8x8xf32> to vector<8x8xbf16>
    %cst_25 = arith.constant dense<0.000000e+00> : vector<32x8xf32>
    %69 = tpu.matmul %67, %68, %cst_25 {dimension_numbers = #tpu.dot_dimension_numbers<[1], [0], [0], [1], [0, 0, 1, 1], [], []>} : vector<32x8xbf16>, vector<8x8xbf16>, vector<32x8xf32> -> vector<32x8xf32>
    %70 = vector.extract_strided_slice %69 {offsets = [0, 0], sizes = [8, 8], strides = [1, 1]} : vector<32x8xf32> to vector<8x8xf32>
    %71 = vector.extract_strided_slice %69 {offsets = [8, 0], sizes = [8, 8], strides = [1, 1]} : vector<32x8xf32> to vector<8x8xf32>
    %72 = vector.extract_strided_slice %69 {offsets = [16, 0], sizes = [8, 8], strides = [1, 1]} : vector<32x8xf32> to vector<8x8xf32>
    %73 = vector.extract_strided_slice %69 {offsets = [24, 0], sizes = [8, 8], strides = [1, 1]} : vector<32x8xf32> to vector<8x8xf32>
    %74 = tpu.concatenate %70, %71, %72, %73 in 1 : vector<8x8xf32>, vector<8x8xf32>, vector<8x8xf32>, vector<8x8xf32> -> vector<8x32xf32>
    %75 = arith.truncf %74 : vector<8x32xf32> to vector<8x32xbf16>
    %cst_26 = arith.constant dense<0.000000e+00> : vector<8x32xf32>
    %76 = tpu.matmul %75, %1, %cst_26 {dimension_numbers = #tpu.dot_dimension_numbers<[1], [0], [0], [1], [0, 0, 1, 1], [], []>} : vector<8x32xbf16>, vector<32x32xbf16>, vector<8x32xf32> -> vector<8x32xf32>
    %77 = vector.broadcast %7 : vector<1x32xf32> to vector<8x32xf32>
    %78 = arith.addf %76, %77 : vector<8x32xf32>
    %79 = arith.addf %78, %12 : vector<8x32xf32>
    %cst_27 = arith.constant dense<0.000000e+00> : vector<8xf32>
    %80 = vector.multi_reduction <add>, %79, %cst_27 [1] : vector<8x32xf32> to vector<8xf32>
    %81 = vector.shape_cast %80 : vector<8xf32> to vector<8x1xf32>
    %cst_28 = arith.constant 3.200000e+01 : f32
    %82 = vector.broadcast %cst_28 : f32 to vector<8x1xf32>
    %83 = arith.divf %81, %82 : vector<8x1xf32>
    %84 = vector.broadcast %83 : vector<8x1xf32> to vector<8x32xf32>
    %85 = arith.subf %79, %84 : vector<8x32xf32>
    %86 = arith.mulf %85, %85 : vector<8x32xf32>
    %cst_29 = arith.constant dense<0.000000e+00> : vector<8xf32>
    %87 = vector.multi_reduction <add>, %86, %cst_29 [1] : vector<8x32xf32> to vector<8xf32>
    %88 = vector.shape_cast %87 : vector<8xf32> to vector<8x1xf32>
    %cst_30 = arith.constant 3.200000e+01 : f32
    %89 = vector.broadcast %cst_30 : f32 to vector<8x1xf32>
    %90 = arith.divf %88, %89 : vector<8x1xf32>
    %91 = vector.broadcast %83 : vector<8x1xf32> to vector<8x32xf32>
    %92 = arith.subf %79, %91 : vector<8x32xf32>
    %cst_31 = arith.constant 9.99999974E-6 : f32
    %93 = vector.broadcast %cst_31 : f32 to vector<8x1xf32>
    %94 = arith.addf %90, %93 : vector<8x1xf32>
    %95 = math.rsqrt %94 : vector<8x1xf32>
    %96 = vector.broadcast %95 : vector<8x1xf32> to vector<8x32xf32>
    %97 = arith.mulf %92, %96 : vector<8x32xf32>
    %98 = vector.broadcast %8 : vector<1x32xf32> to vector<8x32xf32>
    %99 = arith.mulf %97, %98 : vector<8x32xf32>
    %100 = vector.broadcast %9 : vector<1x32xf32> to vector<8x32xf32>
    %101 = arith.addf %99, %100 : vector<8x32xf32>
    %102 = arith.truncf %101 : vector<8x32xf32> to vector<8x32xbf16>
    %cst_32 = arith.constant dense<0.000000e+00> : vector<8x128xf32>
    %103 = tpu.matmul %102, %2, %cst_32 {dimension_numbers = #tpu.dot_dimension_numbers<[1], [0], [0], [1], [0, 0, 1, 1], [], []>} : vector<8x32xbf16>, vector<32x128xbf16>, vector<8x128xf32> -> vector<8x128xf32>
    %104 = vector.broadcast %10 : vector<1x128xf32> to vector<8x128xf32>
    %105 = arith.addf %103, %104 : vector<8x128xf32>
    %cst_33 = arith.constant 5.000000e-01 : f32
    %106 = vector.broadcast %cst_33 : f32 to vector<8x128xf32>
    %107 = arith.mulf %106, %105 : vector<8x128xf32>
    %cst_34 = arith.constant 4.471500e-02 : f32
    %108 = vector.broadcast %cst_34 : f32 to vector<8x128xf32>
    %109 = arith.mulf %108, %105 : vector<8x128xf32>
    %110 = arith.mulf %109, %105 : vector<8x128xf32>
    %111 = arith.mulf %110, %105 : vector<8x128xf32>
    %112 = arith.addf %105, %111 : vector<8x128xf32>
    %cst_35 = arith.constant 0.797884583 : f32
    %113 = vector.broadcast %cst_35 : f32 to vector<8x128xf32>
    %114 = arith.mulf %113, %112 : vector<8x128xf32>
    %115 = math.tanh %114 : vector<8x128xf32>
    %cst_36 = arith.constant 1.000000e+00 : f32
    %116 = vector.broadcast %cst_36 : f32 to vector<8x128xf32>
    %117 = arith.addf %116, %115 : vector<8x128xf32>
    %118 = arith.mulf %107, %117 : vector<8x128xf32>
    %119 = arith.truncf %118 : vector<8x128xf32> to vector<8x128xbf16>
    %cst_37 = arith.constant dense<0.000000e+00> : vector<8x32xf32>
    %120 = tpu.matmul %119, %3, %cst_37 {dimension_numbers = #tpu.dot_dimension_numbers<[1], [0], [0], [1], [0, 0, 1, 1], [], []>} : vector<8x128xbf16>, vector<128x32xbf16>, vector<8x32xf32> -> vector<8x32xf32>
    %121 = vector.broadcast %11 : vector<1x32xf32> to vector<8x32xf32>
    %122 = arith.addf %120, %121 : vector<8x32xf32>
    %123 = arith.addf %122, %79 : vector<8x32xf32>
    %cst_38 = arith.constant 0.000000e+00 : f32
    %124 = vector.broadcast %cst_38 : f32 to vector<8x96xf32>
    %125 = tpu.concatenate %123, %124 in 1 : vector<8x32xf32>, vector<8x96xf32> -> vector<8x128xf32>
    %c0_39 = arith.constant 0 : index
    %c0_40 = arith.constant 0 : index
    %126 = vector.load %arg3[%c0_39, %c0_40] : memref<8x128xf32, #tpu.memory_space<vmem>>, vector<8x128xf32>
    tpu.vector_store %arg3[%c0_39, %c0_40], %125 {strides = array<i32>} : memref<8x128xf32, #tpu.memory_space<vmem>>, vector<8x128xf32>,
    return
  }
}

</mosaic_0001>

<llo_original>
// kernel: tpu_custom_call.1
$region0: #{tpu_custom_call.1}
  #allocation0 [shape = 'u32[]', space=smem, size = 0x4, offset = 0x4, fixed_abs, tag = 'smem constant byte address 0x4 - core index']
  #allocation1 [shape = 'u32[72,128]{1,0:T(1,128)}', space=vmem, size = 0x9000, scoped, tag = 'internal scratch']
  %s0 = inlined_call_operand.hbm [shape: f32[8,32], index: 0, kind: input, shape index: {}]
  %s1 = inlined_call_operand.hbm [shape: bf16[192,128], index: 1, kind: input, shape index: {}]
  %s2 = inlined_call_operand.hbm [shape: f32[8,128], index: 2, kind: input, shape index: {}]
  %s3 = inlined_call_operand.hbm [shape: f32[8,128], index: 3, kind: output, shape index: {}]
  %s4 = sld [smem:[#allocation0]]
  $region34: #{tpu_custom_call.1} parent=0
    _
  %s6 = ssub.s32 1, %s4
  %s7 = scalar_select 0, %s6, %s4
  $region1: #{tpu_custom_call.1} parent=0
    #allocation2 [shape = 'u8[4096]{0}', space=vmem, size = 0x1000, scoped, tag = 'input window, operand 0, single buffered']
    #allocation3 [shape = 's32[1]{0}', space=sflag, size = 0x4, scoped, tag = 'scoped memory for tpu_custom_call.1']
    #allocation4 [shape = 's32[1]{0}', space=sflag, size = 0x4, scoped, tag = 'scoped memory for tpu_custom_call.1']
    #allocation5 [shape = 'u8[49152]{0}', space=vmem, size = 0xc000, scoped, tag = 'input window, operand 1, single buffered']
    #allocation6 [shape = 's32[1]{0}', space=sflag, size = 0x4, scoped, tag = 'scoped memory for tpu_custom_call.1']
    #allocation7 [shape = 'u8[4096]{0}', space=vmem, size = 0x1000, scoped, tag = 'input window, operand 2, single buffered']
    #allocation8 [shape = 'u8[4096]{0}', space=vmem, size = 0x1000, scoped, tag = 'output window, operand 0, single buffered']
    %8 = vsyncpa [#allocation3], 0
    %9 = vsyncpa [#allocation6], 0
    %10 = vsyncpa [#allocation4], 0
    // Predicated region
    $region2: #{tpu_custom_call.1} parent=1 // pred_check
      _
    $region3: #{tpu_custom_call.1} parent=1 // pred_check_branch
      %12 = sbr.rel (0) target = $region5
    $region4: #{tpu_custom_call.1} parent=1 // pred_region
      %14 = vsyncadd [#allocation3], 0
      %s16 = sshll.u32 %s0, 4
      %s17 = int_to_ptr.hbm [resolvable:$true] %s16
      %s18 = sshll.u32 [#allocation2], 4
      %s19 = int_to_ptr.vmem [resolvable:$true] %s18
      %21 = dma.hbm_to_vmem [thread:$0]  %s17, 128, %s19, [#allocation3]
    $region5: #{tpu_custom_call.1} parent=1 // pred_fallthru
      _
    // Predicated region
    $region6: #{tpu_custom_call.1} parent=1 // pred_check
      _
    $region7: #{tpu_custom_call.1} parent=1 // pred_check_branch
      %23 = sbr.rel (0) target = $region9
    $region8: #{tpu_custom_call.1} parent=1 // pred_region
      %25 = vsyncadd [#allocation6], 0
      %s26 = sshll.u32 %s1, 4
      %s27 = int_to_ptr.hbm [resolvable:$true] %s26
      %s28 = sshll.u32 [#allocation5], 4
      %s29 = int_to_ptr.vmem [resolvable:$true] %s28
      %34 = dma.hbm_to_vmem [thread:$0]  %s27, 1536, %s29, [#allocation6], 64, 64, 4
    $region9: #{tpu_custom_call.1} parent=1 // pred_fallthru
      _
    // Predicated region
    $region10: #{tpu_custom_call.1} parent=1 // pred_check
      _
    $region11: #{tpu_custom_call.1} parent=1 // pred_check_branch
      %36 = sbr.rel (0) target = $region13
    $region12: #{tpu_custom_call.1} parent=1 // pred_region
      %38 = vsyncadd [#allocation6], 0
      %s40 = sshll.u32 %s2, 4
      %s41 = int_to_ptr.hbm [resolvable:$true] %s40
      %s42 = sshll.u32 [#allocation7], 4
      %s43 = int_to_ptr.vmem [resolvable:$true] %s42
      %45 = dma.hbm_to_vmem [thread:$0]  %s41, 128, %s43, [#allocation6]
    $region13: #{tpu_custom_call.1} parent=1 // pred_fallthru
      _
    // Predicated region
    $region14: #{tpu_custom_call.1} parent=1 // pred_check
      _
    $region15: #{tpu_custom_call.1} parent=1 // pred_check_branch
      %47 = sbr.rel (0) target = $region17
    $region16: #{tpu_custom_call.1} parent=1 // pred_region
      %49 = dma.done [#allocation3], 128
    $region17: #{tpu_custom_call.1} parent=1 // pred_fallthru
      _
    // Predicated region
    $region18: #{tpu_custom_call.1} parent=1 // pred_check
      _
    $region19: #{tpu_custom_call.1} parent=1 // pred_check_branch
      %51 = sbr.rel (0) target = $region21
    $region20: #{tpu_custom_call.1} parent=1 // pred_region
      %53 = dma.done [#allocation6], 1536
    $region21: #{tpu_custom_call.1} parent=1 // pred_fallthru
      _
    // Predicated region
    $region22: #{tpu_custom_call.1} parent=1 // pred_check
      _
    $region23: #{tpu_custom_call.1} parent=1 // pred_check_branch
      %55 = sbr.rel (0) target = $region25
    $region24: #{tpu_custom_call.1} parent=1 // pred_region
      %57 = dma.done [#allocation6], 128
    $region25: #{tpu_custom_call.1} parent=1 // pred_fallthru
      _
    %v59 = vld [vmem:[#allocation5] sm:$0xf]
    %v60 = vld [vmem:[#allocation5 + $0x4] sm:$0xf]
    %v61 = vld [vmem:[#allocation5 + $0x8] sm:$0xf]
    %v62 = vld [vmem:[#allocation5 + $0xc] sm:$0xf]
    %v63 = vld [vmem:[#allocation5 + $0x10] sm:$0xf]
    %v64 = vld [vmem:[#allocation5 + $0x14] sm:$0xf]
    %v65 = vld [vmem:[#allocation5 + $0x18] sm:$0xf]
    %v66 = vld [vmem:[#allocation5 + $0x1c] sm:$0xf]
    %v67 = vld [vmem:[#allocation5 + $0x20] sm:$0xf]
    %v68 = vld [vmem:[#allocation5 + $0x24] sm:$0xf]
    %v69 = vld [vmem:[#allocation5 + $0x28] sm:$0xf]
    %v70 = vld [vmem:[#allocation5 + $0x2c] sm:$0xf]
    %v71 = vld [vmem:[#allocation5 + $0x30] sm:$0xf]
    %v72 = vld [vmem:[#allocation5 + $0x34] sm:$0xf]
    %v73 = vld [vmem:[#allocation5 + $0x38] sm:$0xf]
    %v74 = vld [vmem:[#allocation5 + $0x3c] sm:$0xf]
    %v75 = vld [vmem:[#allocation5 + $0x40] sm:$0xf]
    %v76 = vld [vmem:[#allocation5 + $0x44] sm:$0xf]
    %v77 = vld [vmem:[#allocation5 + $0x48] sm:$0xf]
    %v78 = vld [vmem:[#allocation5 + $0x4c] sm:$0xf]
    %v79 = vld [vmem:[#allocation5 + $0x50] sm:$0xf]
    %v80 = vld [vmem:[#allocation5 + $0x54] sm:$0xf]
    %v81 = vld [vmem:[#allocation5 + $0x58] sm:$0xf]
    %v82 = vld [vmem:[#allocation5 + $0x5c] sm:$0xf]
    %v83 = vld [vmem:[#allocation7] sm:$0x1]
    %v84 = vld [vmem:[#allocation7 + $0x1] sm:$0x1]
    %v85 = vld [vmem:[#allocation7 + $0x2] sm:$0x1]
    %v86 = vld [vmem:[#allocation7 + $0x3] sm:$0x1]
    %v87 = vld [vmem:[#allocation7 + $0x4] sm:$0x1]
    %v88 = vld [vmem:[#allocation7 + $0x5] sm:$0x1]
    %v89 = vld [vmem:[#allocation7 + $0x6] sm:$0x1]
    %v90 = vld [vmem:[#allocation7 + $0x7] sm:$0x1]
    %v91 = vld [vmem:[#allocation2] sm:$0xff]
    %vm92 = vcmask 261120
    %v93 = vsel %vm92, %v91, 0.0
    %94 = vadd.xlane.f32.xlu0 %v93
    %v95 = vpop.xlane.xlu0 %94
    %v96 = vrcp.pop 32.0
    %v97 = vmul.f32 32.0, %v96
    %v98 = vsub.f32 1.0, %v97
    %v99 = vmul.f32 %v96, %v98
    %v100 = vadd.f32 %v96, %v99
    %vm101 = vweird.f32 %v96
    %v102 = vsel %vm101, %v96, %v100
    %v103 = vmul.f32 %v95, %v102
    %v104 = vsub.f32 %v91, %v103
    %v105 = vmul.f32 %v104, %v104
    %v106 = vsel %vm92, %v105, 0.0
    %107 = vadd.xlane.f32.xlu0 %v106
    %v108 = vpop.xlane.xlu0 %107
    %v109 = vmul.f32 %v108, %v102
    %v110 = vadd.f32 %v109, 1e-05
    %v111 = vrsqrt.pop %v110
    %v112 = vmul.f32 %v111, %v110
    %v113 = vmul.f32 %v112, %v111
    %v114 = vmul.f32 0.5, %v113
    %v115 = vsub.f32 1.5, %v114
    %v116 = vmul.f32 %v111, %v115
    %vm117 = vweird.f32 %v110
    %vm118 = vweird.f32 %v111
    %vm119 = vmor %vm117, %vm118
    %v120 = vsel %vm119, %v111, %v116
    %v121 = vmul.f32 %v104, %v120
    %v122 = vperm.slane %v83, 0
    %v123 = vmul.f32 %v121, %v122
    %v124 = vperm.slane %v84, 0
    %v125 = vadd.f32 %v123, %v124
    %v126 = vpack.c.bf16 %v125, %v125
    %v127 = vperm.slane %v85, 0
    %v132 = vunpack.c.l.b16 %v59
    %v133 = vunpack.c.l.b16 %v60
    %v134 = vunpack.c.l.b16 %v61
    %v135 = vunpack.c.l.b16 %v62
    %v136 = vpack.c.b16 %v133, %v132
    %v137 = vpack.c.b16 %v135, %v134
    %v141 = vsel %vm92, %v126, 0
    %143 = vmatpush.bf16.msra.mxu0 0
    %144 = vmatpush.bf16.msra.mxu0 0
    %145 = vmatpush.bf16.msra.mxu0 0
    %146 = vmatpush.bf16.msra.mxu0 0
    %147 = vmatpush.bf16.msra.mxu0 0
    %148 = vmatpush.bf16.msra.mxu0 0
    %149 = vmatpush.bf16.msra.mxu0 %v137
    %150 = vmatpush.bf16.msra.mxu0 %v136
    %151 = vmatmul.bf16.gmra.mxu0 %v141
    %v152 = vpop.f32.mrf.mxu0
    %v153 = vadd.f32 %v127, %v152
    %v154 = vpop.f32.mrf.mxu0
    %155 = vdwg.mxu0
    %157 = vrot.lane.b32.xlu0 %v153, 120
    %v158 = vpop.permute.xlu0 %157
    %160 = vrot.lane.b32.xlu0 %v153, 112
    %v161 = vpop.permute.xlu0 %160
    %163 = vrot.lane.b32.xlu0 %v153, 104
    %v164 = vpop.permute.xlu0 %163
    %v166 = vpack.c.bf16 %v158, %v153
    %v167 = vpack.c.bf16 %v164, %v161
    %v168 = vpack.c.bf16 %v153, %v153
    %v169 = vlaneseq
    %v170 = vshrl.u32 %v169, 7
    %v171 = vlaneseq
    %v172 = vand.u32 %v171, 127
    %vm173 = vcmp.ge.s32.totalorder %v170, %v172
    %v174 = vsel %vm173, 0.0, -1e+30
    %176 = vrot.lane.b32.xlu0 %v168, 96
    %v177 = vpop.permute.xlu0 %176
    %vm178 = vcmask 64512
    %v180 = vsel %vm178, %v166, 0
    %v183 = vsel %vm178, %v167, 0
    %v186 = vsel %vm178, %v177, 0
    %188 = vmatpush.bf16.xpose.msra.mxu0 0
    %189 = vmatpush.bf16.xpose.msra.mxu0 0
    %190 = vmatpush.bf16.xpose.msra.mxu0 0
    %191 = vmatpush.bf16.xpose.msra.mxu0 0
    %192 = vmatpush.bf16.xpose.msra.mxu0 0
    %193 = vmatpush.bf16.xpose.msra.mxu0 0
    %194 = vmatpush.bf16.xpose.msra.mxu0 0
    %195 = vmatpush.bf16.xpose.msra.mxu0 %v186
    %196 = vmatmul.bf16.gmra.mxu0 %v180
    %v197 = vpop.f32.mrf.mxu0
    %v198 = vadd.f32 %v174, %v197
    %v199 = vpop.f32.mrf.mxu0
    %v200 = vadd.f32 %v174, %v199
    %201 = vmatmul.bf16.gmra.mxu0 %v183
    %v202 = vpop.f32.mrf.mxu0
    %v203 = vadd.f32 %v174, %v202
    %v204 = vpop.f32.mrf.mxu0
    %v205 = vadd.f32 %v174, %v204
    %206 = vdwg.mxu0
    %v207 = vsel %vm178, %v198, -inf
    %208 = vmax.xlane.f32.xlu0 %v207
    %v209 = vpop.xlane.xlu0 %208
    %v210 = vsel %vm178, %v200, -inf
    %211 = vmax.xlane.f32.xlu0 %v210
    %v212 = vpop.xlane.xlu0 %211
    %v213 = vsel %vm178, %v203, -inf
    %214 = vmax.xlane.f32.xlu0 %v213
    %v215 = vpop.xlane.xlu0 %214
    %v216 = vsel %vm178, %v205, -inf
    %217 = vmax.xlane.f32.xlu0 %v216
    %v218 = vpop.xlane.xlu0 %217
    %v219 = vsub.f32 %v198, %v209
    %v220 = vsub.f32 %v200, %v212
    %v221 = vsub.f32 %v203, %v215
    %v222 = vsub.f32 %v205, %v218
    %v223 = vmul.f32 %v219, 1.442695
    %v224 = vpow.pop %v223
    %v225 = vmul.f32 %v220, 1.442695
    %v226 = vpow.pop %v225
    %v227 = vmul.f32 %v221, 1.442695
    %v228 = vpow.pop %v227
    %v229 = vmul.f32 %v222, 1.442695
    %v230 = vpow.pop %v229
    %v231 = vsel %vm178, %v224, 0.0
    %232 = vadd.xlane.f32.xlu0 %v231
    %v233 = vpop.xlane.xlu0 %232
    %v234 = vsel %vm178, %v226, 0.0
    %235 = vadd.xlane.f32.xlu0 %v234
    %v236 = vpop.xlane.xlu0 %235
    %v237 = vsel %vm178, %v228, 0.0
    %238 = vadd.xlane.f32.xlu0 %v237
    %v239 = vpop.xlane.xlu0 %238
    %v240 = vsel %vm178, %v230, 0.0
    %241 = vadd.xlane.f32.xlu0 %v240
    %v242 = vpop.xlane.xlu0 %241
    %v243 = vrcp.pop %v233
    %v244 = vrcp.pop %v236
    %v245 = vrcp.pop %v239
    %v246 = vrcp.pop %v242
    %v247 = vmul.f32 %v224, %v243
    %v248 = vmul.f32 %v226, %v244
    %v249 = vmul.f32 %v228, %v245
    %v250 = vmul.f32 %v230, %v246
    %v251 = vpack.c.bf16 %v248, %v247
    %v252 = vpack.c.bf16 %v250, %v249
    %253 = vrot.lane.b32.xlu0 %v168, 88
    %v254 = vpop.permute.xlu0 %253
    %v256 = vsel %vm178, %v251, 0
    %v259 = vsel %vm178, %v252, 0
    %vm261 = vcmask 1043456
    %v263 = vsel %vm261, %v254, 0
    %265 = vmatpush.bf16.msra.mxu0 0
    %266 = vmatpush.bf16.msra.mxu0 0
    %267 = vmatpush.bf16.msra.mxu0 0
    %268 = vmatpush.bf16.msra.mxu0 0
    %269 = vmatpush.bf16.msra.mxu0 0
    %270 = vmatpush.bf16.msra.mxu0 0
    %271 = vmatpush.bf16.msra.mxu0 0
    %272 = vmatpush.bf16.msra.mxu0 %v263
    %273 = vmatmul.bf16.gmra.mxu0 %v256
    %v274 = vpop.f32.mrf.mxu0
    %v275 = vadd.f32 0.0, %v274
    %v276 = vpop.f32.mrf.mxu0
    %v277 = vadd.f32 0.0, %v276
    %278 = vmatmul.bf16.gmra.mxu0 %v259
    %v279 = vpop.f32.mrf.mxu0
    %v280 = vadd.f32 0.0, %v279
    %v281 = vpop.f32.mrf.mxu0
    %v282 = vadd.f32 0.0, %v281
    %283 = vdwg.mxu0
    %285 = vrot.lane.b32.xlu0 %v277, 8
    %v286 = vpop.permute.xlu0 %285
    %289 = vrot.lane.b32.xlu0 %v280, 16
    %v290 = vpop.permute.xlu0 %289
    %293 = vrot.lane.b32.xlu0 %v282, 24
    %v294 = vpop.permute.xlu0 %293
    %v296 = vsel %vm178, %v275, %v286
    %vm297 = vcmask 130048
    %v298 = vsel %vm297, %v296, %v290
    %vm299 = vcmask 195584
    %v300 = vsel %vm299, %v298, %v294
    %v301 = vpack.c.bf16 %v300, %v300
    %v302 = vperm.slane %v86, 0
    %303 = vrot.lane.b32.xlu0 %v136, 80
    %v304 = vpop.permute.xlu0 %303
    %305 = vrot.lane.b32.xlu0 %v137, 80
    %v306 = vpop.permute.xlu0 %305
    %v310 = vsel %vm92, %v301, 0
    %312 = vmatpush.bf16.msra.mxu0 0
    %313 = vmatpush.bf16.msra.mxu0 0
    %314 = vmatpush.bf16.msra.mxu0 0
    %315 = vmatpush.bf16.msra.mxu0 0
    %316 = vmatpush.bf16.msra.mxu0 0
    %317 = vmatpush.bf16.msra.mxu0 0
    %318 = vmatpush.bf16.msra.mxu0 %v306
    %319 = vmatpush.bf16.msra.mxu0 %v304
    %320 = vmatmul.bf16.gmra.mxu0 %v310
    %v321 = vpop.f32.mrf.mxu0
    %v322 = vadd.f32 %v302, %v321
    %v323 = vpop.f32.mrf.mxu0
    %324 = vdwg.mxu0
    %v325 = vadd.f32 %v322, %v91
    %v326 = vsel %vm92, %v325, 0.0
    %327 = vadd.xlane.f32.xlu0 %v326
    %v328 = vpop.xlane.xlu0 %327
    %v329 = vmul.f32 %v328, %v102
    %v330 = vsub.f32 %v325, %v329
    %v331 = vmul.f32 %v330, %v330
    %v332 = vsel %vm92, %v331, 0.0
    %333 = vadd.xlane.f32.xlu0 %v332
    %v334 = vpop.xlane.xlu0 %333
    %v335 = vmul.f32 %v334, %v102
    %v336 = vadd.f32 %v335, 1e-05
    %v337 = vrsqrt.pop %v336
    %v338 = vmul.f32 %v337, %v336
    %v339 = vmul.f32 %v338, %v337
    %v340 = vmul.f32 0.5, %v339
    %v341 = vsub.f32 1.5, %v340
    %v342 = vmul.f32 %v337, %v341
    %vm343 = vweird.f32 %v336
    %vm344 = vweird.f32 %v337
    %vm345 = vmor %vm343, %vm344
    %v346 = vsel %vm345, %v337, %v342
    %v347 = vmul.f32 %v330, %v346
    %v348 = vperm.slane %v87, 0
    %v349 = vmul.f32 %v347, %v348
    %v350 = vperm.slane %v88, 0
    %v351 = vadd.f32 %v349, %v350
    %v352 = vpack.c.bf16 %v351, %v351
    %v353 = vperm.slane %v89, 0
    %v358 = vunpack.c.l.b16 %v63
    %v359 = vunpack.c.l.b16 %v64
    %v360 = vunpack.c.l.b16 %v65
    %v361 = vunpack.c.l.b16 %v66
    %v362 = vpack.c.b16 %v359, %v358
    %v363 = vpack.c.b16 %v361, %v360
    %v367 = vsel %vm92, %v352, 0
    %369 = vmatpush.bf16.msra.mxu0 0
    %370 = vmatpush.bf16.msra.mxu0 0
    %371 = vmatpush.bf16.msra.mxu0 0
    %372 = vmatpush.bf16.msra.mxu0 0
    %373 = vmatpush.bf16.msra.mxu0 0
    %374 = vmatpush.bf16.msra.mxu0 0
    %375 = vmatpush.bf16.msra.mxu0 %v363
    %376 = vmatpush.bf16.msra.mxu0 %v362
    %377 = vmatmul.bf16.gmra.mxu0 %v367
    %v378 = vpop.f32.mrf.mxu0
    %v379 = vadd.f32 %v353, %v378
    %v380 = vpop.f32.mrf.mxu0
    %381 = vdwg.mxu0
    %v382 = vmul.f32 %v379, 0.5
    %v383 = vmul.f32 %v379, 0.044715
    %v384 = vmul.f32 %v383, %v379
    %v385 = vmul.f32 %v384, %v379
    %v386 = vadd.f32 %v379, %v385
    %v387 = vmul.f32 %v386, 0.7978846
    %v388 = vtanh.pop %v387
    %v389 = vadd.f32 %v388, 1.0
    %v390 = vmul.f32 %v382, %v389
    %v391 = vpack.c.bf16 %v390, %v390
    %v392 = vperm.slane %v90, 0
    %v409 = vunpack.c.l.b16 %v67
    %v410 = vunpack.c.l.b16 %v68
    %v411 = vunpack.c.l.b16 %v69
    %v412 = vunpack.c.l.b16 %v70
    %v413 = vunpack.c.l.b16 %v71
    %v414 = vunpack.c.l.b16 %v72
    %v415 = vunpack.c.l.b16 %v73
    %v416 = vunpack.c.l.b16 %v74
    %v417 = vunpack.c.l.b16 %v75
    %v418 = vunpack.c.l.b16 %v76
    %v419 = vunpack.c.l.b16 %v77
    %v420 = vunpack.c.l.b16 %v78
    %v421 = vunpack.c.l.b16 %v79
    %v422 = vunpack.c.l.b16 %v80
    %v423 = vunpack.c.l.b16 %v81
    %v424 = vunpack.c.l.b16 %v82
    %v425 = vpack.c.b16 %v410, %v409
    %v426 = vpack.c.b16 %v412, %v411
    %v427 = vpack.c.b16 %v414, %v413
    %v428 = vpack.c.b16 %v416, %v415
    %v429 = vpack.c.b16 %v418, %v417
    %v430 = vpack.c.b16 %v420, %v419
    %v431 = vpack.c.b16 %v422, %v421
    %v432 = vpack.c.b16 %v424, %v423
    %441 = vmatpush.bf16.msra.mxu0 %v432
    %442 = vmatpush.bf16.msra.mxu0 %v431
    %443 = vmatpush.bf16.msra.mxu0 %v430
    %444 = vmatpush.bf16.msra.mxu0 %v429
    %445 = vmatpush.bf16.msra.mxu0 %v428
    %446 = vmatpush.bf16.msra.mxu0 %v427
    %447 = vmatpush.bf16.msra.mxu0 %v426
    %448 = vmatpush.bf16.msra.mxu0 %v425
    %449 = vmatmul.bf16.gmra.mxu0 %v391
    %v450 = vpop.f32.mrf.mxu0
    %v451 = vadd.f32 %v392, %v450
    %v452 = vpop.f32.mrf.mxu0
    %453 = vdwg.mxu0
    %v454 = vadd.f32 %v451, %v325
    %v455 = vsel %vm92, %v454, 0.0
    %456 = vst [vmem:[#allocation8] sm:$0xff] %v455
    // Predicated region
    $region26: #{tpu_custom_call.1} parent=1 // pred_check
      _
    $region27: #{tpu_custom_call.1} parent=1 // pred_check_branch
      %458 = sbr.rel (0) target = $region29
    $region28: #{tpu_custom_call.1} parent=1 // pred_region
      %460 = vsyncadd [#allocation4], 0
      %s462 = sshll.u32 [#allocation8], 4
      %s463 = int_to_ptr.vmem [resolvable:$true] %s462
      %s464 = sshll.u32 %s3, 4
      %s465 = int_to_ptr.hbm [resolvable:$true] %s464
      %467 = dma.vmem_to_hbm [thread:$0]  %s463, 128, %s465, [#allocation4]
    $region29: #{tpu_custom_call.1} parent=1 // pred_fallthru
      _
    // Predicated region
    $region30: #{tpu_custom_call.1} parent=1 // pred_check
      _
    $region31: #{tpu_custom_call.1} parent=1 // pred_check_branch
      %469 = sbr.rel (0) target = $region33
    $region32: #{tpu_custom_call.1} parent=1 // pred_region
      %471 = dma.done [#allocation4], 128
    $region33: #{tpu_custom_call.1} parent=1 // pred_fallthru
      _
    %472 = vsyncpa [#allocation3], 1
    %473 = vsyncpa [#allocation6], 1
    %474 = vsyncpa [#allocation4], 1

</llo_original>
